<compile_context>
chip_gen: v5e
topology: v5e:2x2
jax: 0.10.0
libtpu: 0.0.40
codegen_flags: <defaults>
</compile_context>

<pallas_src>
import functools

import jax
import jax.numpy as jnp
from jax import lax
from jax.experimental import pallas as pl
from jax.experimental.pallas import tpu as pltpu


def _l_plus_kernel(z_ref, o_ref, *, eps: float):
    bi = pl.program_id(0)
    bj = pl.program_id(1)

    @pl.when(bi < bj)
    def _():
        # Strictly-upper tile: structurally zero. z_ref is never read here
        # (its index_map is clamped to the resident diagonal block).
        o_ref[...] = jnp.zeros_like(o_ref)

    @pl.when(bi > bj)
    def _():
        # Strictly-lower tile: straight copy, no per-element masking needed.
        o_ref[...] = z_ref[...].astype(o_ref.dtype)

    @pl.when(bi == bj)
    def _():
        # Diagonal tile: square tiles => global row/col offsets cancel, so
        # in-tile iota comparisons are already the global triangle test.
        z = z_ref[...]
        row = lax.broadcasted_iota(jnp.int32, z.shape, 0)
        col = lax.broadcasted_iota(jnp.int32, z.shape, 1)
        zf = z.astype(jnp.float32)
        diag_val = jnp.abs(zf) + jnp.float32(eps)      # |Z_ii| + eps (fp32)
        out = jnp.where(
            row > col, zf,                              # strictly lower: keep Z
            jnp.where(row == col, diag_val,             # diagonal
                      jnp.float32(0.0)),                # strictly upper: zero
        )
        o_ref[...] = out.astype(o_ref.dtype)


def _pick_tile(n: int) -> int:
    """Fixed lane-dense square tile; ragged edges handled via pl.cdiv grid."""
    if n >= 1024:
        return 1024
    if n >= 512:
        return 512
    if n >= 256:
        return 256
    if n >= 128:
        return 128
    return n  # whole matrix in a single full-extent block (always legal)


def l_plus(Z: jax.Array, *, eps: float = 1e-3) -> jax.Array:
    """Pallas equivalent of L_plus.forward(Z); pos = eps * I is folded in."""
    n = Z.shape[0]
    assert Z.shape == (n, n), "L_plus expects a square matrix"

    t = _pick_tile(n)
    grid = (pl.cdiv(n, t), pl.cdiv(n, t))

    kernel = functools.partial(_l_plus_kernel, eps=eps)
    return pl.pallas_call(
        kernel,
        out_shape=jax.ShapeDtypeStruct((n, n), Z.dtype),
        grid=grid,
        # Clamp the column block index to the diagonal: for bi < bj the mapped
        # block (i, i) is already resident, so the pipeline skips the refetch.
        in_specs=[pl.BlockSpec((t, t), lambda i, j: (i, jnp.minimum(j, i)))],
        out_specs=pl.BlockSpec((t, t), lambda i, j: (i, j)),
        compiler_params=pltpu.CompilerParams(
            dimension_semantics=("parallel", "arbitrary"),
            vmem_limit_bytes=32 * 1024 * 1024,
        ),
    )(Z)


def _reference(Z: jax.Array, eps: float = 1e-3) -> jax.Array:
    n = Z.shape[0]
    return (jnp.tril(Z, -1)
            + jnp.diag(jnp.abs(jnp.diag(Z)))
            + eps * jnp.eye(n, dtype=Z.dtype))


if __name__ == "__main__":
    key = jax.random.PRNGKey(0)
    # Small single-block case and a multi-tile ragged case (exercises the
    # clamped index_map, the copy branch, and the ragged last blocks).
    for n in (32, 160):
        Z = jax.random.normal(jax.random.fold_in(key, n), (n, n),
                              dtype=jnp.float32)
        out = l_plus(Z)
        jax.block_until_ready(out)
        ref = _reference(Z)
        assert jnp.allclose(out, ref, atol=1e-6), f"mismatch vs reference (n={n})"
    print("KERNEL_OK")
</pallas_src>

<mosaic_0001>
module attributes {stable_mosaic.version = 11 : i64} {
  func.func @_l_plus_kernel(%arg0: i32, %arg1: i32, %arg2: memref<32x32xf32, #tpu.memory_space<vmem>>, %arg3: memref<32x32xf32, #tpu.memory_space<vmem>>) attributes {dimension_semantics = [#tpu.dimension_semantics<parallel>, #tpu.dimension_semantics<arbitrary>], iteration_bounds = array<i64: 1, 1>, scalar_prefetch = 0 : i64, scratch_operands = 0 : i64, tpu.core_type = #tpu.core_type<tc>, window_params = [{transform_indices = @transform_0, window_bounds = array<i64: 32, 32>}, {transform_indices = @transform_1, window_bounds = array<i64: 32, 32>}]} {
    %0 = arith.cmpi slt, %arg0, %arg1 : i32
    %1 = arith.extui %0 : i1 to i32
    %c0_i32 = arith.constant 0 : i32
    %2 = arith.cmpi ne, %1, %c0_i32 : i32
    scf.if %2 {
      %cst = arith.constant 0.000000e+00 : f32
      %9 = vector.broadcast %cst : f32 to vector<32x32xf32>
      %c0 = arith.constant 0 : index
      %c0_2 = arith.constant 0 : index
      %10 = vector.load %arg3[%c0, %c0_2] : memref<32x32xf32, #tpu.memory_space<vmem>>, vector<32x32xf32>
      tpu.vector_store %arg3[%c0, %c0_2], %9 {strides = array<i32>} : memref<32x32xf32, #tpu.memory_space<vmem>>, vector<32x32xf32>,
    } else {
    }
    %3 = arith.cmpi sgt, %arg0, %arg1 : i32
    %4 = arith.extui %3 : i1 to i32
    %c0_i32_0 = arith.constant 0 : i32
    %5 = arith.cmpi ne, %4, %c0_i32_0 : i32
    scf.if %5 {
      %c0 = arith.constant 0 : index
      %c0_2 = arith.constant 0 : index
      %9 = vector.load %arg2[%c0, %c0_2] : memref<32x32xf32, #tpu.memory_space<vmem>>, vector<32x32xf32>
      %c0_3 = arith.constant 0 : index
      %c0_4 = arith.constant 0 : index
      %10 = vector.load %arg3[%c0_3, %c0_4] : memref<32x32xf32, #tpu.memory_space<vmem>>, vector<32x32xf32>
      tpu.vector_store %arg3[%c0_3, %c0_4], %9 {strides = array<i32>} : memref<32x32xf32, #tpu.memory_space<vmem>>, vector<32x32xf32>,
    } else {
    }
    %6 = arith.cmpi eq, %arg0, %arg1 : i32
    %7 = arith.extui %6 : i1 to i32
    %c0_i32_1 = arith.constant 0 : i32
    %8 = arith.cmpi ne, %7, %c0_i32_1 : i32
    scf.if %8 {
      %c0 = arith.constant 0 : index
      %c0_2 = arith.constant 0 : index
      %9 = vector.load %arg2[%c0, %c0_2] : memref<32x32xf32, #tpu.memory_space<vmem>>, vector<32x32xf32>
      %10 = tpu.iota {dimensions = array<i32: 0>} : vector<32x32xi32>
      %11 = tpu.iota {dimensions = array<i32: 1>} : vector<32x32xi32>
      %12 = math.absf %9 : vector<32x32xf32>
      %cst = arith.constant 1.000000e-03 : f32
      %13 = vector.broadcast %cst : f32 to vector<32x32xf32>
      %14 = arith.addf %12, %13 : vector<32x32xf32>
      %15 = arith.cmpi sgt, %10, %11 : vector<32x32xi32>
      %16 = arith.cmpi eq, %10, %11 : vector<32x32xi32>
      %cst_3 = arith.constant 0.000000e+00 : f32
      %17 = vector.broadcast %cst_3 : f32 to vector<32x32xf32>
      %18 = arith.select %16, %14, %17 : vector<32x32xi1>, vector<32x32xf32>
      %19 = arith.select %15, %9, %18 : vector<32x32xi1>, vector<32x32xf32>
      %c0_4 = arith.constant 0 : index
      %c0_5 = arith.constant 0 : index
      %20 = vector.load %arg3[%c0_4, %c0_5] : memref<32x32xf32, #tpu.memory_space<vmem>>, vector<32x32xf32>
      tpu.vector_store %arg3[%c0_4, %c0_5], %19 {strides = array<i32>} : memref<32x32xf32, #tpu.memory_space<vmem>>, vector<32x32xf32>,
    } else {
    }
    return
  }
  func.func @transform_0(%arg0: i32, %arg1: i32) -> (i32, i32) {
    %0 = arith.minsi %arg1, %arg0 : i32
    %c0_i32 = arith.constant 0 : i32
    return %arg0, %0 : i32, i32
  }
  func.func @transform_1(%arg0: i32, %arg1: i32) -> (i32, i32) {
    %c0_i32 = arith.constant 0 : i32
    return %arg0, %arg1 : i32, i32
  }
}

</mosaic_0001>

<llo_original>
// kernel: tpu_custom_call.1
$region0: #{tpu_custom_call.1}
  #allocation0 [shape = 'u32[]', space=smem, size = 0x4, offset = 0x4, fixed_abs, tag = 'smem constant byte address 0x4 - core index']
  #allocation1 [shape = 'u32[72,128]{1,0:T(1,128)}', space=vmem, size = 0x9000, scoped, tag = 'internal scratch']
  %s0 = inlined_call_operand.hbm [shape: f32[32,32], index: 0, kind: input, shape index: {}]
  %s1 = inlined_call_operand.hbm [shape: f32[32,32], index: 1, kind: output, shape index: {}]
  %s2 = sld [smem:[#allocation0]]
  $region30: #{tpu_custom_call.1} parent=0
    _
  %s4 = ssub.s32 1, %s2
  %s5 = scalar_select 0, %s4, %s2
  $region1: #{tpu_custom_call.1} parent=0
    #allocation2 [shape = 'u8[16384]{0}', space=vmem, size = 0x4000, scoped, tag = 'input window, operand 0, single buffered']
    #allocation3 [shape = 's32[1]{0}', space=sflag, size = 0x4, scoped, tag = 'scoped memory for tpu_custom_call.1']
    #allocation4 [shape = 's32[1]{0}', space=sflag, size = 0x4, scoped, tag = 'scoped memory for tpu_custom_call.1']
    #allocation5 [shape = 'u8[16384]{0}', space=vmem, size = 0x4000, scoped, tag = 'output window, operand 0, single buffered']
    %6 = vsyncpa [#allocation3], 0
    %7 = vsyncpa [#allocation4], 0
    // Predicated region
    $region2: #{tpu_custom_call.1} parent=1 // pred_check
      _
    $region3: #{tpu_custom_call.1} parent=1 // pred_check_branch
      %9 = sbr.rel (0) target = $region5
    $region4: #{tpu_custom_call.1} parent=1 // pred_region
      %11 = vsyncadd [#allocation3], 0
      %s12 = sshll.u32 %s0, 4
      %s13 = int_to_ptr.hbm [resolvable:$true] %s12
      %s14 = sshll.u32 [#allocation2], 4
      %s15 = int_to_ptr.vmem [resolvable:$true] %s14
      %20 = dma.hbm_to_vmem [thread:$0]  %s13, 512, %s15, [#allocation3], 128, 128, 8
    $region5: #{tpu_custom_call.1} parent=1 // pred_fallthru
      _
    // Predicated region
    $region6: #{tpu_custom_call.1} parent=1 // pred_check
      _
    $region7: #{tpu_custom_call.1} parent=1 // pred_check_branch
      %22 = sbr.rel (0) target = $region9
    $region8: #{tpu_custom_call.1} parent=1 // pred_region
      %24 = dma.done [#allocation3], 512
    $region9: #{tpu_custom_call.1} parent=1 // pred_fallthru
      _
    %p25 = scmp.lt.s32.totalorder 0, 0
    // Predicated region
    $region10: #{tpu_custom_call.1} parent=1 // pred_check
      %p26 = pneg %p25
    $region11: #{tpu_custom_call.1} parent=1 // pred_check_branch
      %28 = sbr.rel (%p26) target = $region13
    $region12: #{tpu_custom_call.1} parent=1 // pred_region
      %vm29 = vcmask 261120
      %30 = vst.msk [vmem:[#allocation5] sm:$0xff] %vm29, 0.0
      %31 = vst.msk [vmem:[#allocation5 + $0x8] sm:$0xff] %vm29, 0.0
      %32 = vst.msk [vmem:[#allocation5 + $0x10] sm:$0xff] %vm29, 0.0
      %33 = vst.msk [vmem:[#allocation5 + $0x18] sm:$0xff] %vm29, 0.0
    $region13: #{tpu_custom_call.1} parent=1 // pred_fallthru
      _
    %p34 = scmp.gt.s32.totalorder 0, 0
    // Predicated region
    $region14: #{tpu_custom_call.1} parent=1 // pred_check
      %p35 = pneg %p34
    $region15: #{tpu_custom_call.1} parent=1 // pred_check_branch
      %37 = sbr.rel (%p35) target = $region17
    $region16: #{tpu_custom_call.1} parent=1 // pred_region
      %v38 = vld [vmem:[#allocation2] sm:$0xff]
      %v39 = vld [vmem:[#allocation2 + $0x8] sm:$0xff]
      %v40 = vld [vmem:[#allocation2 + $0x10] sm:$0xff]
      %v41 = vld [vmem:[#allocation2 + $0x18] sm:$0xff]
      %vm42 = vcmask 261120
      %43 = vst.msk [vmem:[#allocation5] sm:$0xff] %vm42, %v38
      %44 = vst.msk [vmem:[#allocation5 + $0x8] sm:$0xff] %vm42, %v39
      %45 = vst.msk [vmem:[#allocation5 + $0x10] sm:$0xff] %vm42, %v40
      %46 = vst.msk [vmem:[#allocation5 + $0x18] sm:$0xff] %vm42, %v41
    $region17: #{tpu_custom_call.1} parent=1 // pred_fallthru
      _
    %p47 = scmp.eq.s32.totalorder 0, 0
    // Predicated region
    $region18: #{tpu_custom_call.1} parent=1 // pred_check
      %p48 = pneg %p47
    $region19: #{tpu_custom_call.1} parent=1 // pred_check_branch
      %50 = sbr.rel (%p48) target = $region21
    $region20: #{tpu_custom_call.1} parent=1 // pred_region
      %v51 = vld [vmem:[#allocation2] sm:$0xff]
      %v52 = vld [vmem:[#allocation2 + $0x8] sm:$0xff]
      %v53 = vld [vmem:[#allocation2 + $0x10] sm:$0xff]
      %v54 = vld [vmem:[#allocation2 + $0x18] sm:$0xff]
      %v55 = vlaneseq
      %v56 = vshrl.u32 %v55, 7
      %v57 = vadd.s32 %v56, 8
      %v58 = vadd.s32 %v56, 16
      %v59 = vadd.s32 %v56, 24
      %v60 = vlaneseq
      %v61 = vand.u32 %v60, 127
      %v62 = vand.u32 2147483647, %v51
      %v63 = vand.u32 2147483647, %v52
      %v64 = vand.u32 2147483647, %v53
      %v65 = vand.u32 2147483647, %v54
      %v66 = vadd.f32 %v62, 0.001
      %v67 = vadd.f32 %v63, 0.001
      %v68 = vadd.f32 %v64, 0.001
      %v69 = vadd.f32 %v65, 0.001
      %vm70 = vcmp.gt.s32.totalorder %v56, %v61
      %vm71 = vcmp.gt.s32.totalorder %v57, %v61
      %vm72 = vcmp.gt.s32.totalorder %v58, %v61
      %vm73 = vcmp.gt.s32.totalorder %v59, %v61
      %vm74 = vcmp.eq.s32.totalorder %v56, %v61
      %vm75 = vcmp.eq.s32.totalorder %v57, %v61
      %vm76 = vcmp.eq.s32.totalorder %v58, %v61
      %vm77 = vcmp.eq.s32.totalorder %v59, %v61
      %v78 = vsel %vm74, %v66, 0.0
      %v79 = vsel %vm75, %v67, 0.0
      %v80 = vsel %vm76, %v68, 0.0
      %v81 = vsel %vm77, %v69, 0.0
      %v82 = vsel %vm70, %v51, %v78
      %v83 = vsel %vm71, %v52, %v79
      %v84 = vsel %vm72, %v53, %v80
      %v85 = vsel %vm73, %v54, %v81
      %vm86 = vcmask 261120
      %87 = vst.msk [vmem:[#allocation5] sm:$0xff] %vm86, %v82
      %88 = vst.msk [vmem:[#allocation5 + $0x8] sm:$0xff] %vm86, %v83
      %89 = vst.msk [vmem:[#allocation5 + $0x10] sm:$0xff] %vm86, %v84
      %90 = vst.msk [vmem:[#allocation5 + $0x18] sm:$0xff] %vm86, %v85
    $region21: #{tpu_custom_call.1} parent=1 // pred_fallthru
      _
    // Predicated region
    $region22: #{tpu_custom_call.1} parent=1 // pred_check
      _
    $region23: #{tpu_custom_call.1} parent=1 // pred_check_branch
      %92 = sbr.rel (0) target = $region25
    $region24: #{tpu_custom_call.1} parent=1 // pred_region
      %94 = vsyncadd [#allocation4], 0
      %s95 = sshll.u32 [#allocation5], 4
      %s96 = int_to_ptr.vmem [resolvable:$true] %s95
      %s97 = sshll.u32 %s1, 4
      %s98 = int_to_ptr.hbm [resolvable:$true] %s97
      %103 = dma.vmem_to_hbm [thread:$0]  %s96, 512, %s98, [#allocation4], 128, 128, 8
    $region25: #{tpu_custom_call.1} parent=1 // pred_fallthru
      _
    // Predicated region
    $region26: #{tpu_custom_call.1} parent=1 // pred_check
      _
    $region27: #{tpu_custom_call.1} parent=1 // pred_check_branch
      %105 = sbr.rel (0) target = $region29
    $region28: #{tpu_custom_call.1} parent=1 // pred_region
      %107 = dma.done [#allocation4], 512
    $region29: #{tpu_custom_call.1} parent=1 // pred_fallthru
      _
    %108 = vsyncpa [#allocation3], 1
    %109 = vsyncpa [#allocation4], 1

</llo_original>
